<compile_context>
chip_gen: v7x
topology: tpu7x:2x2x1
jax: 0.10.0
libtpu: 0.0.40
codegen_flags: <defaults>
</compile_context>

<pallas_src>
import jax
import jax.numpy as jnp
from jax.experimental import pallas as pl
from jax.experimental.pallas import tpu as pltpu

LANE = 128


def mlp_kernel(x_ref, p_ref, o_ref):
    """Fused 2-layer MLP, batch lane-dense and lane-padded, VPU/XLU-only math.

    x_ref : (F, Bp)            input, batch on the lane axis, Bp % 128 == 0
    p_ref : (H, F+1+O+1)       packed params: [ w1 | b1 | w2^T | b2(rows 0..O-1) ]
    o_ref : (O, Bp)            output, batch on the lane axis
    """
    F, Bp = x_ref.shape
    H, W = p_ref.shape
    O = W - F - 2

    # Single tiny load of the packed slab; static slices carve out the params.
    p = p_ref[...]                         # (H, F+1+O+1)
    w1 = p[:, 0:F]                         # (H, F)
    b1 = p[:, F:F + 1]                     # (H, 1)
    w2 = p[:, F + 1:F + 1 + O]             # (H, O)   (== torch w2 transposed)
    b2 = p[0:O, F + 1 + O:F + 2 + O]       # (O, 1)   (only rows 0..O-1 valid)

    # Hidden layer: K == F (== 1 here) -> sum of rank-1 outer products on the VPU.
    acc = jnp.broadcast_to(b1, (H, Bp))
    for f in range(F):                     # static unroll, F tiny
        acc = acc + w1[:, f:f + 1] * x_ref[f:f + 1, :]
    h = jnp.maximum(acc, 0.0)              # (H, Bp) relu

    # Output layer: N == O (== 1 here) -> elementwise mul + cross-sublane reduce
    # (XLU), one full-width unmasked (1, Bp) store per output row.
    for o in range(O):                     # static unroll, O tiny
        row = (jnp.sum(w2[:, o:o + 1] * h, axis=0, keepdims=True)
               + b2[o:o + 1, :])           # (1, Bp)
        o_ref[o:o + 1, :] = row.astype(o_ref.dtype)


@jax.jit
def net_forward(x, w1, b1, w2, b2):
    """Forward pass of `Net`.

    x : (B, F) float32
    w1: (H, F)  torch `hidden.weight` layout,  b1: (H,)
    w2: (O, H)  torch `predict.weight` layout, b2: (O,)
    returns (B, O) float32
    """
    B, F = x.shape
    H = w1.shape[0]
    O = w2.shape[0]
    Bp = ((B + LANE - 1) // LANE) * LANE   # lane-pad batch to a multiple of 128

    # One packed parameter slab (H, F+1+O+1): [ w1 | b1 | w2^T | b2 ].
    b2_col = jnp.zeros((H, 1), x.dtype).at[:O, 0].set(b2.astype(x.dtype))
    params = jnp.concatenate(
        [w1, b1.reshape(H, 1), jnp.transpose(w2), b2_col], axis=1)

    # Lane-dense, zero-padded input (F, Bp).  For F == 1 the (B,1)->(1,B) move
    # is a pure reshape; the general case uses a transpose that XLA fuses.
    x_lane = x.reshape(1, B) if F == 1 else jnp.transpose(x)
    x_lane = jnp.pad(x_lane, ((0, 0), (0, Bp - B)))

    cost = pl.CostEstimate(
        flops=2 * Bp * H * (F + O),
        transcendentals=0,
        bytes_accessed=4 * (F * Bp + H * (F + O + 2) + O * Bp),
    )

    vmem = pl.BlockSpec(memory_space=pltpu.MemorySpace.VMEM)
    out_lane = pl.pallas_call(
        mlp_kernel,
        out_shape=jax.ShapeDtypeStruct((O, Bp), x.dtype),
        in_specs=[vmem, vmem],
        out_specs=vmem,
        cost_estimate=cost,
    )(x_lane, params)

    out = out_lane[:, :B]                  # drop padded (garbage) lanes
    return out.reshape(B, O) if O == 1 else jnp.transpose(out)


def init_params(key, n_features, n_hidden, n_output):
    """torch.nn.Linear-style init U(-1/sqrt(fan_in), 1/sqrt(fan_in)), torch layouts."""
    k1, k2, k3, k4 = jax.random.split(key, 4)
    bound1 = 1.0 / jnp.sqrt(jnp.float32(n_features))
    bound2 = 1.0 / jnp.sqrt(jnp.float32(n_hidden))
    w1 = jax.random.uniform(k1, (n_hidden, n_features), jnp.float32, -bound1, bound1)
    b1 = jax.random.uniform(k2, (n_hidden,), jnp.float32, -bound1, bound1)
    w2 = jax.random.uniform(k3, (n_output, n_hidden), jnp.float32, -bound2, bound2)
    b2 = jax.random.uniform(k4, (n_output,), jnp.float32, -bound2, bound2)
    return w1, b1, w2, b2


if __name__ == "__main__":
    # Shapes implied by the original script:
    #   x = unsqueeze(linspace(-1, 1, 100), dim=1)  ->  (100, 1)
    #   Net(n_features=1, n_hidden=10, n_output=1)
    n_features, n_hidden, n_output = 1, 10, 1
    batch = 100

    key = jax.random.PRNGKey(0)
    w1, b1, w2, b2 = init_params(key, n_features, n_hidden, n_output)

    x = jnp.linspace(-1.0, 1.0, batch, dtype=jnp.float32).reshape(batch, 1)

    y = jax.block_until_ready(net_forward(x, w1, b1, w2, b2))

    # Pure-JAX reference (same math, torch-layout weights).
    y_ref = jnp.maximum(x @ w1.T + b1, 0.0) @ w2.T + b2
    assert y.shape == (batch, n_output)
    assert jnp.allclose(y, y_ref, atol=1e-5, rtol=1e-5)

    # TODO(synk): the torch script's training loop (MSELoss + SGD) is not part
    # of the module's forward pass and is not implemented here.
    print("KERNEL_OK")
</pallas_src>

<mosaic_0001>
module attributes {stable_mosaic.version = 11 : i64} {
  func.func @mlp_kernel(%arg0: memref<1x128xf32, #tpu.memory_space<vmem>>, %arg1: memref<10x4xf32, #tpu.memory_space<vmem>>, %arg2: memref<1x128xf32, #tpu.memory_space<vmem>>) attributes {dimension_semantics = [], scalar_prefetch = 0 : i64, scratch_operands = 0 : i64, tpu.core_type = #tpu.core_type<tc>} {
    %c0 = arith.constant 0 : index
    %c0_0 = arith.constant 0 : index
    %0 = vector.load %arg1[%c0, %c0_0] : memref<10x4xf32, #tpu.memory_space<vmem>>, vector<10x4xf32>
    %1 = vector.extract_strided_slice %0 {offsets = [0, 0], sizes = [10, 1], strides = [1, 1]} : vector<10x4xf32> to vector<10x1xf32>
    %2 = vector.extract_strided_slice %0 {offsets = [0, 1], sizes = [10, 1], strides = [1, 1]} : vector<10x4xf32> to vector<10x1xf32>
    %3 = vector.extract_strided_slice %0 {offsets = [0, 2], sizes = [10, 1], strides = [1, 1]} : vector<10x4xf32> to vector<10x1xf32>
    %4 = vector.extract_strided_slice %0 {offsets = [0, 3], sizes = [1, 1], strides = [1, 1]} : vector<10x4xf32> to vector<1x1xf32>
    %5 = vector.shape_cast %2 : vector<10x1xf32> to vector<10x1xf32>
    %6 = vector.broadcast %5 : vector<10x1xf32> to vector<10x128xf32>
    %c0_1 = arith.constant 0 : index
    %c0_2 = arith.constant 0 : index
    %7 = vector.load %arg0[%c0_1, %c0_2] : memref<1x128xf32, #tpu.memory_space<vmem>>, vector<1x128xf32>
    %8 = vector.broadcast %1 : vector<10x1xf32> to vector<10x128xf32>
    %9 = vector.broadcast %7 : vector<1x128xf32> to vector<10x128xf32>
    %10 = arith.mulf %8, %9 : vector<10x128xf32>
    %11 = arith.addf %6, %10 : vector<10x128xf32>
    %cst = arith.constant 0.000000e+00 : f32
    %12 = vector.broadcast %cst : f32 to vector<10x128xf32>
    %13 = arith.maximumf %11, %12 : vector<10x128xf32>
    %14 = vector.broadcast %3 : vector<10x1xf32> to vector<10x128xf32>
    %15 = arith.mulf %14, %13 : vector<10x128xf32>
    %cst_3 = arith.constant dense<0.000000e+00> : vector<128xf32>
    %16 = vector.multi_reduction <add>, %15, %cst_3 [0] : vector<10x128xf32> to vector<128xf32>
    %17 = vector.shape_cast %16 : vector<128xf32> to vector<1x128xf32>
    %18 = vector.broadcast %4 : vector<1x1xf32> to vector<1x128xf32>
    %19 = arith.addf %17, %18 : vector<1x128xf32>
    %c0_4 = arith.constant 0 : index
    %c0_5 = arith.constant 0 : index
    %20 = vector.load %arg2[%c0_4, %c0_5] : memref<1x128xf32, #tpu.memory_space<vmem>>, vector<1x128xf32>
    tpu.vector_store %arg2[%c0_4, %c0_5], %19 {strides = array<i32>} : memref<1x128xf32, #tpu.memory_space<vmem>>, vector<1x128xf32>,
    return
  }
}

</mosaic_0001>

<llo_original>
// kernel: net_forward.1
$region0: #{net_forward.1}
  #allocation0 [shape = 'u32[]', space=smem, size = 0x4, offset = 0x4, fixed_abs, tag = 'smem constant byte address 0x4 - core index']
  #allocation1 [shape = 'u32[144,128]{1,0:T(1,128)}', space=vmem, size = 0x12000, scoped, tag = 'internal scratch']
  %s0 = inlined_call_operand.vmem [shape: f32[1,128], index: 0, kind: input, shape index: {}]
  %s1 = inlined_call_operand.vmem [shape: f32[10,4], index: 1, kind: input, shape index: {}]
  %s2 = inlined_call_operand.vmem [shape: f32[1,128], index: 2, kind: output, shape index: {}]
  %s3 = sld [smem:[#allocation0]]
  $region18: #{net_forward.1} parent=0
    _
  %s5 = ssub.s32 1, %s3
  %s6 = scalar_select 0, %s5, %s3
  // Predicated region
  $region2: #{net_forward.1} parent=0 // pred_check
    _
  $region3: #{net_forward.1} parent=0 // pred_check_branch
    %8 = sbr.rel (0) target = $region5
  $region4: #{net_forward.1} parent=0 // pred_region
    _
  $region5: #{net_forward.1} parent=0 // pred_fallthru
    _
  // Predicated region
  $region6: #{net_forward.1} parent=0 // pred_check
    _
  $region7: #{net_forward.1} parent=0 // pred_check_branch
    %10 = sbr.rel (0) target = $region9
  $region8: #{net_forward.1} parent=0 // pred_region
    _
  $region9: #{net_forward.1} parent=0 // pred_fallthru
    _
  %v11 = vld [vmem:[%s1] sm:$0xff]
  %v12 = vld [vmem:[%s1 + $0x8] sm:$0x3]
  %14 = vset.pattern.permute.xlu0 1
  %15 = vperm.xlu0 %14, %v11
  %v16 = vpop.permute.xlu0 %15
  %19 = vset.pattern.permute.xlu0 1
  %20 = vperm.xlu0 %19, %v12
  %v21 = vpop.permute.xlu0 %20
  %v23 = vld [vmem:[%s0] sm:$0x1]
  %24 = vset.pattern.permute.xlu0 0
  %25 = vperm.xlu0 %24, %v11
  %v26 = vpop.permute.xlu0 %25
  %28 = vset.pattern.permute.xlu0 0
  %29 = vperm.xlu0 %28, %v12
  %v30 = vpop.permute.xlu0 %29
  %v33 = vlaneseq
  %v34 = vshrl.u32 %v33, 7
  %v35 = vsub.s32 0, %v34
  %v36 = vrot.slane %v23, %v35
  %v38 = vmul.f32 %v26, %v36
  %v39 = vmul.f32 %v30, %v36
  %v40 = vadd.f32 %v16, %v38
  %v41 = vadd.f32 %v21, %v39
  %v42 = vmax.f32 %v40, 0.0
  %v43 = vmax.f32 %v41, 0.0
  %44 = vset.pattern.permute.xlu0 2
  %45 = vperm.xlu0 %44, %v11
  %v46 = vpop.permute.xlu0 %45
  %48 = vset.pattern.permute.xlu0 2
  %49 = vperm.xlu0 %48, %v12
  %v50 = vpop.permute.xlu0 %49
  %v52 = vmul.f32 %v46, %v42
  %v53 = vmul.f32 %v50, %v43
  %vm54 = vcmask 1041408
  %v55 = vsel %vm54, %v53, 0.0
  %v56 = vadd.f32 %v52, %v55
  %v57 = vrot.slane %v56, 4
  %v58 = vadd.f32 %v56, %v57
  %v59 = vrot.slane %v58, 2
  %v60 = vadd.f32 %v58, %v59
  %v61 = vrot.slane %v60, 1
  %v62 = vadd.f32 %v60, %v61
  %63 = vset.pattern.permute.xlu0 3
  %64 = vperm.xlu0 %63, %v11
  %v65 = vpop.permute.xlu0 %64
  %v67 = vadd.f32 %v62, %v65
  %68 = vst [vmem:[%s2] sm:$0x1] %v67
  // Predicated region
  $region10: #{net_forward.1} parent=0 // pred_check
    _
  $region11: #{net_forward.1} parent=0 // pred_check_branch
    %70 = sbr.rel (0) target = $region13
  $region12: #{net_forward.1} parent=0 // pred_region
    _
  $region13: #{net_forward.1} parent=0 // pred_fallthru
    _
  // Predicated region
  $region14: #{net_forward.1} parent=0 // pred_check
    _
  $region15: #{net_forward.1} parent=0 // pred_check_branch
    %72 = sbr.rel (0) target = $region17
  $region16: #{net_forward.1} parent=0 // pred_region
    _
  $region17: #{net_forward.1} parent=0 // pred_fallthru
    _

</llo_original>
